<compile_context>
chip_gen: v7x
topology: tpu7x:2x2x1
jax: 0.10.0
libtpu: 0.0.40
codegen_flags: <defaults>
</compile_context>

<pallas_src>
import functools

import jax
import jax.numpy as jnp
from jax.experimental import pallas as pl
from jax.experimental.pallas import tpu as pltpu


def _replication_matrix(G, W, dtype):
    """0/1 matrix P with P[rho*W + w, (2*rho + a)*2*W + 2*w + b] = 1, a,b in {0,1}.

    Right-multiplying a (rows, G*W) block by P performs, for each group of G
    consecutive image rows, both the 2x column duplication and the 2x row
    duplication of nearest-neighbor upsampling. Each output element picks up
    exactly one input element (times 1.0), so the matmul is exact.
    """
    gw = G * W
    i = jnp.arange(gw)
    rho, w = i // W, i % W                     # (sub-row, col) of the input element
    j = jnp.arange(4 * gw)
    orow, ocol = j // (2 * W), j % (2 * W)     # (sub-row, col) of the output element
    p = (orow[None, :] // 2 == rho[:, None]) & (ocol[None, :] // 2 == w[:, None])
    return p.astype(dtype)


def _pick_block_rows(mg, row_bytes, cap_bytes=4 << 20):
    """Largest row tile that divides mg, is a multiple of 8, and keeps the per-step
    (input + output) payload under cap_bytes. The pipeline double-buffers it, so total
    VMEM stays comfortably under v7x's 32 MiB scoped default (v5e/v6e have more)."""
    tm = min(mg, 1024, max(1, cap_bytes // max(row_bytes, 1)))
    tm = (tm // 8) * 8
    while tm >= 8 and mg % tm != 0:
        tm -= 8
    if tm < 8:
        tm = mg          # full-extent block is always a legal block shape
    return tm


def _upsample2x_kernel(x_ref, p_ref, o_ref, *, acc_dtype):
    # x_ref: (TM, G*W) tile, p_ref: (G*W, 4*G*W) resident, o_ref: (TM, 4*G*W) tile.
    # One MXU matmul does column interleave + row duplication; output stores are
    # full-width (>=128 lanes); everything stays in the input dtype.
    o_ref[...] = jnp.dot(
        x_ref[...], p_ref[...], preferred_element_type=acc_dtype
    ).astype(o_ref.dtype)


def upsample_nearest_2x(x):
    N, C, H, W = x.shape
    M = N * C * H

    # Group G consecutive input rows per flat row so the flat output row width
    # 4*G*W reaches >= 128 lanes (unmasked stores); shrink G if it doesn't divide M.
    G = max(1, -(-32 // W))              # ceil(32 / W)
    while M % G != 0:
        G -= 1
    Wg, Wo, Mg = G * W, 4 * G * W, M // G

    itemsize = jnp.dtype(x.dtype).itemsize
    TM = _pick_block_rows(Mg, (Wg + Wo) * itemsize)
    grid = (Mg // TM,)

    # TODO(synk): for very large W (>~512) the resident P (O((G*W)^2) bytes) should be
    # tiled along the column axis too; typical UNet upsample sizes are far below that.
    p = _replication_matrix(G, W, x.dtype)
    x2 = x.reshape(Mg, Wg)

    acc_dtype = jnp.float32 if jnp.issubdtype(x.dtype, jnp.floating) else jnp.int32

    out2 = pl.pallas_call(
        functools.partial(_upsample2x_kernel, acc_dtype=acc_dtype),
        out_shape=jax.ShapeDtypeStruct((Mg, Wo), x.dtype),
        grid=grid,
        in_specs=[
            pl.BlockSpec((TM, Wg), lambda i: (i, 0)),   # row tile of the input
            pl.BlockSpec((Wg, Wo), lambda i: (0, 0)),   # P: grid-invariant, stays in VMEM
        ],
        out_specs=pl.BlockSpec((TM, Wo), lambda i: (i, 0)),
        compiler_params=pltpu.CompilerParams(
            dimension_semantics=("parallel",)),         # v7x: both TCs split the rows
    )(x2, p)

    return out2.reshape(N, C, 2 * H, 2 * W)


if __name__ == "__main__":
    key = jax.random.PRNGKey(0)
    x = jax.random.normal(key, (2, 4, 16, 16), dtype=jnp.float32)

    y = jax.block_until_ready(upsample_nearest_2x(x))

    # Reference semantics of nn.functional.interpolate(scale_factor=2, mode='nearest').
    y_ref = jnp.repeat(jnp.repeat(x, 2, axis=2), 2, axis=3)

    assert y.shape == (2, 4, 32, 32), y.shape
    assert y.dtype == x.dtype
    assert bool(jnp.array_equal(y, y_ref)), "mismatch vs nearest-neighbor reference"
    print("KERNEL_OK")
</pallas_src>

<mosaic_0001>
module attributes {stable_mosaic.version = 11 : i64} {
  func.func @_upsample2x_kernel(%arg0: i32, %arg1: memref<64x32xf32, #tpu.memory_space<vmem>>, %arg2: memref<32x128xf32, #tpu.memory_space<vmem>>, %arg3: memref<64x128xf32, #tpu.memory_space<vmem>>) attributes {dimension_semantics = [#tpu.dimension_semantics<parallel>], iteration_bounds = array<i64: 1>, scalar_prefetch = 0 : i64, scratch_operands = 0 : i64, tpu.core_type = #tpu.core_type<tc>, window_params = [{transform_indices = @transform_0, window_bounds = array<i64: 64, 32>}, {pipeline_mode = #tpu.pipeline_mode<synchronous>, transform_indices = @transform_1, window_bounds = array<i64: 32, 128>}, {transform_indices = @transform_2, window_bounds = array<i64: 64, 128>}]} {
    %c0 = arith.constant 0 : index
    %c0_0 = arith.constant 0 : index
    %0 = vector.load %arg1[%c0, %c0_0] : memref<64x32xf32, #tpu.memory_space<vmem>>, vector<64x32xf32>
    %c0_1 = arith.constant 0 : index
    %c0_2 = arith.constant 0 : index
    %1 = vector.load %arg2[%c0_1, %c0_2] : memref<32x128xf32, #tpu.memory_space<vmem>>, vector<32x128xf32>
    %cst = arith.constant dense<0.000000e+00> : vector<64x128xf32>
    %2 = tpu.matmul %0, %1, %cst {dimension_numbers = #tpu.dot_dimension_numbers<[1], [0], [0], [1], [0, 0, 1, 1], [], []>} : vector<64x32xf32>, vector<32x128xf32>, vector<64x128xf32> -> vector<64x128xf32>
    %c0_3 = arith.constant 0 : index
    %c0_4 = arith.constant 0 : index
    %3 = vector.load %arg3[%c0_3, %c0_4] : memref<64x128xf32, #tpu.memory_space<vmem>>, vector<64x128xf32>
    tpu.vector_store %arg3[%c0_3, %c0_4], %2 {strides = array<i32>} : memref<64x128xf32, #tpu.memory_space<vmem>>, vector<64x128xf32>,
    return
  }
  func.func @transform_0(%arg0: i32) -> (i32, i32) {
    %c0_i32 = arith.constant 0 : i32
    %c0_i32_0 = arith.constant 0 : i32
    return %arg0, %c0_i32 : i32, i32
  }
  func.func @transform_1(%arg0: i32) -> (i32, i32) {
    %c0_i32 = arith.constant 0 : i32
    %c0_i32_0 = arith.constant 0 : i32
    %c0_i32_1 = arith.constant 0 : i32
    return %c0_i32, %c0_i32_0 : i32, i32
  }
  func.func @transform_2(%arg0: i32) -> (i32, i32) {
    %c0_i32 = arith.constant 0 : i32
    %c0_i32_0 = arith.constant 0 : i32
    return %arg0, %c0_i32 : i32, i32
  }
}

</mosaic_0001>

<llo_original>
// kernel: tpu_custom_call.1
$region0: #{tpu_custom_call.1}
  #allocation0 [shape = 'u32[]', space=smem, size = 0x4, offset = 0x4, fixed_abs, tag = 'smem constant byte address 0x4 - core index']
  #allocation1 [shape = 'u32[144,128]{1,0:T(1,128)}', space=vmem, size = 0x12000, scoped, tag = 'internal scratch']
  %s0 = inlined_call_operand.vmem [shape: f32[64,32], index: 0, kind: input, shape index: {}]
  %s1 = inlined_call_operand.vmem [shape: f32[32,128], index: 1, kind: input, shape index: {}]
  %s2 = inlined_call_operand.hbm [shape: f32[64,128], index: 2, kind: output, shape index: {}]
  %s3 = sld [smem:[#allocation0]]
  $region18: #{tpu_custom_call.1} parent=0
    _
  %s5 = ssub.s32 1, %s3
  %s6 = scalar_select 0, %s5, %s3
  $region1: #{tpu_custom_call.1} parent=0
    #allocation2 [shape = 'u8[32768]{0}', space=vmem, size = 0x8000, scoped, tag = 'output window, operand 0, single buffered']
    #allocation3 [shape = 's32[1]{0}', space=sflag, size = 0x4, scoped, tag = 'scoped memory for tpu_custom_call.1']
    %7 = vsyncpa [#allocation3], 0
    // Predicated region
    $region2: #{tpu_custom_call.1} parent=1 // pred_check
      _
    $region3: #{tpu_custom_call.1} parent=1 // pred_check_branch
      %9 = sbr.rel (0) target = $region5
    $region4: #{tpu_custom_call.1} parent=1 // pred_region
      _
    $region5: #{tpu_custom_call.1} parent=1 // pred_fallthru
      _
    // Predicated region
    $region6: #{tpu_custom_call.1} parent=1 // pred_check
      _
    $region7: #{tpu_custom_call.1} parent=1 // pred_check_branch
      %11 = sbr.rel (0) target = $region9
    $region8: #{tpu_custom_call.1} parent=1 // pred_region
      _
    $region9: #{tpu_custom_call.1} parent=1 // pred_fallthru
      _
    %v12 = vld [vmem:[%s0] sm:$0xff]
    %v13 = vld [vmem:[%s0 + $0x8] sm:$0xff]
    %v14 = vld [vmem:[%s0 + $0x10] sm:$0xff]
    %v15 = vld [vmem:[%s0 + $0x18] sm:$0xff]
    %v16 = vld [vmem:[%s0 + $0x20] sm:$0xff]
    %v17 = vld [vmem:[%s0 + $0x28] sm:$0xff]
    %v18 = vld [vmem:[%s0 + $0x30] sm:$0xff]
    %v19 = vld [vmem:[%s0 + $0x38] sm:$0xff]
    %v20 = vld [vmem:[%s1] sm:$0xff]
    %v21 = vld [vmem:[%s1 + $0x8] sm:$0xff]
    %v22 = vld [vmem:[%s1 + $0x10] sm:$0xff]
    %v23 = vld [vmem:[%s1 + $0x18] sm:$0xff]
    %vm24 = vcmask 261120
    %v26 = vsel %vm24, %v12, 0
    %v29 = vsel %vm24, %v13, 0
    %v32 = vsel %vm24, %v14, 0
    %v35 = vsel %vm24, %v15, 0
    %v38 = vsel %vm24, %v16, 0
    %v41 = vsel %vm24, %v17, 0
    %v44 = vsel %vm24, %v18, 0
    %v47 = vsel %vm24, %v19, 0
    %49 = vmatprep.subr.mxu0 0.0
    %50 = vmatpush1.msra.mxu0 %v20
    %51 = vmatprep.subr.mxu0 0.0
    %52 = vmatpush1.msra.mxu0 %v21
    %53 = vmatprep.subr.mxu0 0.0
    %54 = vmatpush1.msra.mxu0 %v22
    %55 = vmatprep.subr.mxu0 0.0
    %56 = vmatpush1.msra.mxu0 %v23
    %57 = vmatprep.subr.mxu0 0.0
    %58 = vmatpush1.msra.mxu0 0.0
    %59 = vmatprep.subr.mxu0 0.0
    %60 = vmatpush1.msra.mxu0 0.0
    %61 = vmatprep.subr.mxu0 0.0
    %62 = vmatpush1.msra.mxu0 0.0
    %63 = vmatprep.subr.mxu0 0.0
    %64 = vmatpush1.msra.mxu0 0.0
    %65 = vmatprep.subr.mxu0 0.0
    %66 = vmatpush1.msra.mxu0 0.0
    %67 = vmatprep.subr.mxu0 0.0
    %68 = vmatpush1.msra.mxu0 0.0
    %69 = vmatprep.subr.mxu0 0.0
    %70 = vmatpush1.msra.mxu0 0.0
    %71 = vmatprep.subr.mxu0 0.0
    %72 = vmatpush1.msra.mxu0 0.0
    %73 = vmatprep.subr.mxu0 0.0
    %74 = vmatpush1.msra.mxu0 0.0
    %75 = vmatprep.subr.mxu0 0.0
    %76 = vmatpush1.msra.mxu0 0.0
    %77 = vmatprep.subr.mxu0 0.0
    %78 = vmatpush1.msra.mxu0 0.0
    %79 = vmatprep.subr.mxu0 0.0
    %80 = vmatpush1.msra.mxu0 0.0
    %81 = vmatprep.subr.mxu0 0.0
    %82 = vmatpush1.msra.mxu0 0.0
    %83 = vmatprep.subr.mxu0 0.0
    %84 = vmatpush1.msra.mxu0 0.0
    %85 = vmatprep.subr.mxu0 0.0
    %86 = vmatpush1.msra.mxu0 0.0
    %87 = vmatprep.subr.mxu0 0.0
    %88 = vmatpush1.msra.mxu0 0.0
    %89 = vmatprep.subr.mxu0 0.0
    %90 = vmatpush1.msra.mxu0 0.0
    %91 = vmatprep.subr.mxu0 0.0
    %92 = vmatpush1.msra.mxu0 0.0
    %93 = vmatprep.subr.mxu0 0.0
    %94 = vmatpush1.msra.mxu0 0.0
    %95 = vmatprep.subr.mxu0 0.0
    %96 = vmatpush1.msra.mxu0 0.0
    %97 = vmatprep.subr.mxu0 0.0
    %98 = vmatpush1.msra.mxu0 0.0
    %99 = vmatprep.subr.mxu0 0.0
    %100 = vmatpush1.msra.mxu0 0.0
    %101 = vmatprep.subr.mxu0 0.0
    %102 = vmatpush1.msra.mxu0 0.0
    %103 = vmatprep.subr.mxu0 0.0
    %104 = vmatpush1.msra.mxu0 0.0
    %105 = vmatprep.subr.mxu0 0.0
    %106 = vmatpush1.msra.mxu0 0.0
    %107 = vmatprep.subr.mxu0 0.0
    %108 = vmatpush1.msra.mxu0 0.0
    %109 = vmatprep.subr.mxu0 0.0
    %110 = vmatpush1.msra.mxu0 0.0
    %111 = vmatprep.subr.mxu0 0.0
    %112 = vmatpush1.msra.mxu0 0.0
    %113 = vmatprep.mubr.f32.mxu0 0.0
    %114 = vmatmul.mubr.f32.gmra.mrb[0].mxu0 %v26
    %v115 = vpop.f32.mrb[0].mxu0
    %v116 = vadd.f32 0.0, %v115
    %v117 = vpop.f32.mrb[0].mxu0
    %118 = vmatprep.mubr.f32.mxu0 0.0
    %119 = vmatmul.mubr.f32.gmra.mrb[0].mxu0 %v29
    %v120 = vpop.f32.mrb[0].mxu0
    %v121 = vadd.f32 0.0, %v120
    %v122 = vpop.f32.mrb[0].mxu0
    %123 = vmatprep.mubr.f32.mxu0 0.0
    %124 = vmatmul.mubr.f32.gmra.mrb[0].mxu0 %v32
    %v125 = vpop.f32.mrb[0].mxu0
    %v126 = vadd.f32 0.0, %v125
    %v127 = vpop.f32.mrb[0].mxu0
    %128 = vmatprep.mubr.f32.mxu0 0.0
    %129 = vmatmul.mubr.f32.gmra.mrb[0].mxu0 %v35
    %v130 = vpop.f32.mrb[0].mxu0
    %v131 = vadd.f32 0.0, %v130
    %v132 = vpop.f32.mrb[0].mxu0
    %133 = vmatprep.mubr.f32.mxu0 0.0
    %134 = vmatmul.mubr.f32.gmra.mrb[0].mxu0 %v38
    %v135 = vpop.f32.mrb[0].mxu0
    %v136 = vadd.f32 0.0, %v135
    %v137 = vpop.f32.mrb[0].mxu0
    %138 = vmatprep.mubr.f32.mxu0 0.0
    %139 = vmatmul.mubr.f32.gmra.mrb[0].mxu0 %v41
    %v140 = vpop.f32.mrb[0].mxu0
    %v141 = vadd.f32 0.0, %v140
    %v142 = vpop.f32.mrb[0].mxu0
    %143 = vmatprep.mubr.f32.mxu0 0.0
    %144 = vmatmul.mubr.f32.gmra.mrb[0].mxu0 %v44
    %v145 = vpop.f32.mrb[0].mxu0
    %v146 = vadd.f32 0.0, %v145
    %v147 = vpop.f32.mrb[0].mxu0
    %148 = vmatprep.mubr.f32.mxu0 0.0
    %149 = vmatmul.mubr.f32.gmra.mrb[0].mxu0 %v47
    %v150 = vpop.f32.mrb[0].mxu0
    %v151 = vadd.f32 0.0, %v150
    %v152 = vpop.f32.mrb[0].mxu0
    %153 = vdwg.mxu0
    %154 = vst [vmem:[#allocation2] sm:$0xff] %v116
    %155 = vst [vmem:[#allocation2 + $0x8] sm:$0xff] %v121
    %156 = vst [vmem:[#allocation2 + $0x10] sm:$0xff] %v126
    %157 = vst [vmem:[#allocation2 + $0x18] sm:$0xff] %v131
    %158 = vst [vmem:[#allocation2 + $0x20] sm:$0xff] %v136
    %159 = vst [vmem:[#allocation2 + $0x28] sm:$0xff] %v141
    %160 = vst [vmem:[#allocation2 + $0x30] sm:$0xff] %v146
    %161 = vst [vmem:[#allocation2 + $0x38] sm:$0xff] %v151
    // Predicated region
    $region10: #{tpu_custom_call.1} parent=1 // pred_check
      _
    $region11: #{tpu_custom_call.1} parent=1 // pred_check_branch
      %163 = sbr.rel (0) target = $region13
    $region12: #{tpu_custom_call.1} parent=1 // pred_region
      %s165 = ssub.s32 1024, 1024
      %166 = vsyncadd [#allocation3], %s165
      %s167 = sshll.u32 [#allocation2], 4
      %s168 = int_to_ptr.vmem [resolvable:$true] %s167
      %173 = dma.vmem_to_hbm [thread:$0]  %s168, 1024, %s2, [#allocation3], 128, 128, 8
    $region13: #{tpu_custom_call.1} parent=1 // pred_fallthru
      _
    // Predicated region
    $region14: #{tpu_custom_call.1} parent=1 // pred_check
      _
    $region15: #{tpu_custom_call.1} parent=1 // pred_check_branch
      %175 = sbr.rel (0) target = $region17
    $region16: #{tpu_custom_call.1} parent=1 // pred_region
      %176 = dma.done [#allocation3], 1024
    $region17: #{tpu_custom_call.1} parent=1 // pred_fallthru
      _
    %177 = vsyncpa [#allocation3], 1

</llo_original>
